<compile_context>
chip_gen: v7x
topology: tpu7x:2x2x1
jax: 0.10.0
libtpu: 0.0.40
codegen_flags: <defaults>
</compile_context>

<pallas_src>
import functools

import jax
import jax.numpy as jnp
from jax import lax
from jax.experimental import pallas as pl
from jax.experimental.pallas import tpu as pltpu


def _round_up(v, mult):
    return ((v + mult - 1) // mult) * mult


def _am_softmax_kernel(x_ref, w_ref, lab_ref, nll_ref,
                       m_sc, l_sc, t_sc,
                       *, scale, margin, num_classes, mxu_dtype):
    # x_ref:   (TB, Hp)  f32     w_ref: (Hp, TS) f32   lab_ref: (TB, 1) i32
    # nll_ref: (TB, 1)   f32 out
    # m_sc/l_sc/t_sc: (TB, 1) f32 scratch (running max / sum-exp / target logit)
    j = pl.program_id(1)
    ns = pl.num_programs(1)

    @pl.when(j == 0)
    def _init():
        m_sc[...] = jnp.full_like(m_sc, -jnp.inf)
        l_sc[...] = jnp.zeros_like(l_sc)
        t_sc[...] = jnp.zeros_like(t_sc)

    # ---- L2 normalization in f32 (VPU) ------------------------------------
    x = x_ref[...].astype(jnp.float32)
    x_inv = lax.rsqrt(jnp.maximum(jnp.sum(x * x, axis=-1, keepdims=True),
                                  jnp.float32(1e-24)))
    xn = x * x_inv

    w = w_ref[...].astype(jnp.float32)
    w_inv = lax.rsqrt(jnp.maximum(jnp.sum(w * w, axis=0, keepdims=True),
                                  jnp.float32(1e-24)))
    wn = w * w_inv

    # ---- cosine logits on the MXU: bf16 operands, f32 accumulation --------
    cos = jnp.dot(xn.astype(mxu_dtype), wn.astype(mxu_dtype),
                  preferred_element_type=jnp.float32)        # (TB, TS)

    tb, ts = cos.shape
    col = lax.broadcasted_iota(jnp.int32, (tb, ts), 1) + j * ts
    is_target = col == lab_ref[...]                          # (TB, TS) bool
    is_valid = col < num_classes                             # mask lane padding

    logits = scale * cos - (scale * margin) * is_target.astype(jnp.float32)
    logits = jnp.where(is_valid, logits, jnp.float32(-1e30))

    # ---- online (flash-style) log-sum-exp ----------------------------------
    m_prev = m_sc[...]
    m_new = jnp.maximum(m_prev, jnp.max(logits, axis=-1, keepdims=True))
    alpha = jnp.exp(m_prev - m_new)
    p = jnp.exp(logits - m_new)
    l_sc[...] = alpha * l_sc[...] + jnp.sum(p, axis=-1, keepdims=True)
    m_sc[...] = m_new

    # the target logit appears in exactly one class tile
    t_sc[...] += jnp.sum(
        jnp.where(jnp.logical_and(is_target, is_valid), logits, 0.0),
        axis=-1, keepdims=True)

    @pl.when(j == ns - 1)
    def _finalize():
        lse = m_sc[...] + jnp.log(l_sc[...])
        nll_ref[...] = lse - t_sc[...]                       # per-row NLL


def am_softmax_loss(x_BxH, labels_B, W_HxS, s=30.0, m=0.4,
                    *, mxu_dtype=jnp.bfloat16, class_tile=512):
    """Pallas equivalent of AMSoftmaxLoss.forward (W has shape (hidden, speakers))."""
    B, H = x_BxH.shape
    Hw, S = W_HxS.shape
    assert Hw == H
    # TODO(synk): the PyTorch module runtime-asserts 0 <= labels < speaker_num;
    # out-of-range labels are not checked inside the kernel.

    tb = _round_up(B, 8) if B <= 128 else 128
    b_pad = _round_up(B, tb)
    ts = min(class_tile, _round_up(S, 128))
    s_pad = _round_up(S, ts)
    h_pad = _round_up(H, 8)
    nb, ns = b_pad // tb, s_pad // ts

    x_p = jnp.pad(x_BxH.astype(jnp.float32), ((0, b_pad - B), (0, h_pad - H)))
    w_p = jnp.pad(W_HxS.astype(jnp.float32), ((0, h_pad - H), (0, s_pad - S)))
    lab_p = jnp.pad(labels_B.astype(jnp.int32), (0, b_pad - B)).reshape(b_pad, 1)

    kernel = functools.partial(
        _am_softmax_kernel, scale=float(s), margin=float(m),
        num_classes=S, mxu_dtype=mxu_dtype)

    nll_rows = pl.pallas_call(
        kernel,
        out_shape=jax.ShapeDtypeStruct((b_pad, 1), jnp.float32),
        grid_spec=pltpu.PrefetchScalarGridSpec(
            num_scalar_prefetch=0,
            grid=(nb, ns),
            in_specs=[
                pl.BlockSpec((tb, h_pad), lambda i, j: (i, 0)),   # x tile
                pl.BlockSpec((h_pad, ts), lambda i, j: (0, j)),   # W tile
                pl.BlockSpec((tb, 1), lambda i, j: (i, 0)),       # labels
            ],
            out_specs=pl.BlockSpec((tb, 1), lambda i, j: (i, 0)),
            scratch_shapes=[
                pltpu.VMEM((tb, 1), jnp.float32),   # running max
                pltpu.VMEM((tb, 1), jnp.float32),   # running sum-exp
                pltpu.VMEM((tb, 1), jnp.float32),   # target logit
            ],
        ),
        compiler_params=pltpu.CompilerParams(
            dimension_semantics=("parallel", "arbitrary"),
            vmem_limit_bytes=32 * 1024 * 1024,
        ),
    )(x_p, w_p, lab_p)

    # mean over the real batch (padded rows sliced off); multiply by 1/B.
    return jnp.sum(nll_rows[:B, 0]) * jnp.float32(1.0 / B)


if __name__ == "__main__":
    # Small shapes consistent with the module: B=8, hidden_dim=32, speaker_num=16
    B, H, S = 8, 32, 16
    s_scale, margin = 30.0, 0.4

    key = jax.random.PRNGKey(0)
    kx, kl, kw = jax.random.split(key, 3)

    x = jax.random.normal(kx, (B, H), dtype=jnp.float32)
    labels = jax.random.randint(kl, (B,), 0, S, dtype=jnp.int32)
    # xavier_normal_ on a (H, S) parameter: std = sqrt(2 / (H + S))
    W = jax.random.normal(kw, (H, S), dtype=jnp.float32) * jnp.sqrt(2.0 / (H + S))

    loss = am_softmax_loss(x, labels, W, s=s_scale, m=margin)
    jax.block_until_ready(loss)

    # Pure-JAX f32 reference (same math as the PyTorch forward)
    w_norm = W / jnp.maximum(jnp.linalg.norm(W, axis=0, keepdims=True), 1e-12)
    x_norm = x / jnp.maximum(jnp.linalg.norm(x, axis=1, keepdims=True), 1e-12)
    wf = x_norm @ w_norm                                           # (B, S) cosines
    onehot = jax.nn.one_hot(labels, S, dtype=jnp.float32)
    logits_ref = s_scale * (wf - margin * onehot)
    target_ref = jnp.sum(logits_ref * onehot, axis=-1)
    ref = jnp.mean(jax.nn.logsumexp(logits_ref, axis=-1) - target_ref)

    # bf16 MXU operands -> allow a small tolerance vs. the f32 reference
    assert jnp.allclose(loss, ref, rtol=2e-2, atol=2e-2), (loss, ref)

    print("KERNEL_OK")
</pallas_src>

<mosaic_0001>
module attributes {stable_mosaic.version = 11 : i64} {
  func.func @_am_softmax_kernel(%arg0: i32, %arg1: i32, %arg2: memref<8x32xf32, #tpu.memory_space<vmem>>, %arg3: memref<32x128xf32, #tpu.memory_space<vmem>>, %arg4: memref<8x1xi32, #tpu.memory_space<vmem>>, %arg5: memref<8x1xf32, #tpu.memory_space<vmem>>, %arg6: memref<8x1xf32, #tpu.memory_space<vmem>>, %arg7: memref<8x1xf32, #tpu.memory_space<vmem>>, %arg8: memref<8x1xf32, #tpu.memory_space<vmem>>) attributes {dimension_semantics = [#tpu.dimension_semantics<parallel>, #tpu.dimension_semantics<arbitrary>], iteration_bounds = array<i64: 1, 1>, scalar_prefetch = 0 : i64, scratch_operands = 3 : i64, tpu.core_type = #tpu.core_type<tc>, window_params = [{transform_indices = @transform_0, window_bounds = array<i64: 8, 32>}, {transform_indices = @transform_1, window_bounds = array<i64: 32, 128>}, {transform_indices = @transform_2, window_bounds = array<i64: 8, 1>}, {transform_indices = @transform_3, window_bounds = array<i64: 8, 1>}]} {
    %c0_i32 = arith.constant 0 : i32
    %0 = arith.cmpi eq, %arg1, %c0_i32 : i32
    %1 = arith.extui %0 : i1 to i32
    %c0_i32_0 = arith.constant 0 : i32
    %2 = arith.cmpi ne, %1, %c0_i32_0 : i32
    scf.if %2 {
      %cst_31 = arith.constant 0xFF800000 : f32
      %69 = vector.broadcast %cst_31 : f32 to vector<8x1xf32>
      %c0_32 = arith.constant 0 : index
      %c0_33 = arith.constant 0 : index
      %70 = vector.load %arg6[%c0_32, %c0_33] : memref<8x1xf32, #tpu.memory_space<vmem>>, vector<8x1xf32>
      tpu.vector_store %arg6[%c0_32, %c0_33], %69 {strides = array<i32>} : memref<8x1xf32, #tpu.memory_space<vmem>>, vector<8x1xf32>,
      %cst_34 = arith.constant 0.000000e+00 : f32
      %71 = vector.broadcast %cst_34 : f32 to vector<8x1xf32>
      %c0_35 = arith.constant 0 : index
      %c0_36 = arith.constant 0 : index
      %72 = vector.load %arg7[%c0_35, %c0_36] : memref<8x1xf32, #tpu.memory_space<vmem>>, vector<8x1xf32>
      tpu.vector_store %arg7[%c0_35, %c0_36], %71 {strides = array<i32>} : memref<8x1xf32, #tpu.memory_space<vmem>>, vector<8x1xf32>,
      %cst_37 = arith.constant 0.000000e+00 : f32
      %73 = vector.broadcast %cst_37 : f32 to vector<8x1xf32>
      %c0_38 = arith.constant 0 : index
      %c0_39 = arith.constant 0 : index
      %74 = vector.load %arg8[%c0_38, %c0_39] : memref<8x1xf32, #tpu.memory_space<vmem>>, vector<8x1xf32>
      tpu.vector_store %arg8[%c0_38, %c0_39], %73 {strides = array<i32>} : memref<8x1xf32, #tpu.memory_space<vmem>>, vector<8x1xf32>,
    } else {
    }
    %c0 = arith.constant 0 : index
    %c0_1 = arith.constant 0 : index
    %3 = vector.load %arg2[%c0, %c0_1] : memref<8x32xf32, #tpu.memory_space<vmem>>, vector<8x32xf32>
    %4 = arith.mulf %3, %3 : vector<8x32xf32>
    %cst = arith.constant dense<0.000000e+00> : vector<8xf32>
    %5 = vector.multi_reduction <add>, %4, %cst [1] : vector<8x32xf32> to vector<8xf32>
    %6 = vector.shape_cast %5 : vector<8xf32> to vector<8x1xf32>
    %cst_2 = arith.constant 1.000000e-24 : f32
    %7 = vector.broadcast %cst_2 : f32 to vector<8x1xf32>
    %8 = arith.maximumf %6, %7 : vector<8x1xf32>
    %9 = math.rsqrt %8 : vector<8x1xf32>
    %10 = vector.broadcast %9 : vector<8x1xf32> to vector<8x32xf32>
    %11 = arith.mulf %3, %10 : vector<8x32xf32>
    %c0_3 = arith.constant 0 : index
    %c0_4 = arith.constant 0 : index
    %12 = vector.load %arg3[%c0_3, %c0_4] : memref<32x128xf32, #tpu.memory_space<vmem>>, vector<32x128xf32>
    %13 = arith.mulf %12, %12 : vector<32x128xf32>
    %cst_5 = arith.constant dense<0.000000e+00> : vector<128xf32>
    %14 = vector.multi_reduction <add>, %13, %cst_5 [0] : vector<32x128xf32> to vector<128xf32>
    %15 = vector.shape_cast %14 : vector<128xf32> to vector<1x128xf32>
    %cst_6 = arith.constant 1.000000e-24 : f32
    %16 = vector.broadcast %cst_6 : f32 to vector<1x128xf32>
    %17 = arith.maximumf %15, %16 : vector<1x128xf32>
    %18 = math.rsqrt %17 : vector<1x128xf32>
    %19 = vector.broadcast %18 : vector<1x128xf32> to vector<32x128xf32>
    %20 = arith.mulf %12, %19 : vector<32x128xf32>
    %21 = arith.truncf %11 : vector<8x32xf32> to vector<8x32xbf16>
    %22 = arith.truncf %20 : vector<32x128xf32> to vector<32x128xbf16>
    %cst_7 = arith.constant dense<0.000000e+00> : vector<8x128xf32>
    %23 = tpu.matmul %21, %22, %cst_7 {dimension_numbers = #tpu.dot_dimension_numbers<[1], [0], [0], [1], [0, 0, 1, 1], [], []>} : vector<8x32xbf16>, vector<32x128xbf16>, vector<8x128xf32> -> vector<8x128xf32>
    %24 = tpu.iota {dimensions = array<i32: 1>} : vector<8x128xi32>
    %c128_i32 = arith.constant 128 : i32
    %25 = arith.muli %arg1, %c128_i32 : i32
    %26 = vector.broadcast %25 : i32 to vector<8x128xi32>
    %27 = arith.addi %24, %26 : vector<8x128xi32>
    %c0_8 = arith.constant 0 : index
    %c0_9 = arith.constant 0 : index
    %28 = vector.load %arg4[%c0_8, %c0_9] : memref<8x1xi32, #tpu.memory_space<vmem>>, vector<8x1xi32>
    %29 = vector.broadcast %28 : vector<8x1xi32> to vector<8x128xi32>
    %30 = arith.cmpi eq, %27, %29 : vector<8x128xi32>
    %c16_i32 = arith.constant 16 : i32
    %31 = vector.broadcast %c16_i32 : i32 to vector<8x128xi32>
    %32 = arith.cmpi slt, %27, %31 : vector<8x128xi32>
    %cst_10 = arith.constant 3.000000e+01 : f32
    %33 = vector.broadcast %cst_10 : f32 to vector<8x128xf32>
    %34 = arith.mulf %33, %23 : vector<8x128xf32>
    %35 = arith.extui %30 : vector<8x128xi1> to vector<8x128xi32>
    %36 = arith.sitofp %35 : vector<8x128xi32> to vector<8x128xf32>
    %cst_11 = arith.constant 1.200000e+01 : f32
    %37 = vector.broadcast %cst_11 : f32 to vector<8x128xf32>
    %38 = arith.mulf %37, %36 : vector<8x128xf32>
    %39 = arith.subf %34, %38 : vector<8x128xf32>
    %cst_12 = arith.constant -1.000000e+30 : f32
    %40 = vector.broadcast %cst_12 : f32 to vector<8x128xf32>
    %41 = arith.select %32, %39, %40 : vector<8x128xi1>, vector<8x128xf32>
    %c0_13 = arith.constant 0 : index
    %c0_14 = arith.constant 0 : index
    %42 = vector.load %arg6[%c0_13, %c0_14] : memref<8x1xf32, #tpu.memory_space<vmem>>, vector<8x1xf32>
    %cst_15 = arith.constant dense<0xFF800000> : vector<8xf32>
    %43 = vector.multi_reduction <maximumf>, %41, %cst_15 [1] : vector<8x128xf32> to vector<8xf32>
    %44 = vector.shape_cast %43 : vector<8xf32> to vector<8x1xf32>
    %45 = arith.maximumf %42, %44 : vector<8x1xf32>
    %46 = arith.subf %42, %45 : vector<8x1xf32>
    %47 = math.exp %46 : vector<8x1xf32>
    %48 = vector.broadcast %45 : vector<8x1xf32> to vector<8x128xf32>
    %49 = arith.subf %41, %48 : vector<8x128xf32>
    %50 = math.exp %49 : vector<8x128xf32>
    %c0_16 = arith.constant 0 : index
    %c0_17 = arith.constant 0 : index
    %51 = vector.load %arg7[%c0_16, %c0_17] : memref<8x1xf32, #tpu.memory_space<vmem>>, vector<8x1xf32>
    %52 = arith.mulf %47, %51 : vector<8x1xf32>
    %cst_18 = arith.constant dense<0.000000e+00> : vector<8xf32>
    %53 = vector.multi_reduction <add>, %50, %cst_18 [1] : vector<8x128xf32> to vector<8xf32>
    %54 = vector.shape_cast %53 : vector<8xf32> to vector<8x1xf32>
    %55 = arith.addf %52, %54 : vector<8x1xf32>
    %c0_19 = arith.constant 0 : index
    %c0_20 = arith.constant 0 : index
    %56 = vector.load %arg7[%c0_19, %c0_20] : memref<8x1xf32, #tpu.memory_space<vmem>>, vector<8x1xf32>
    tpu.vector_store %arg7[%c0_19, %c0_20], %55 {strides = array<i32>} : memref<8x1xf32, #tpu.memory_space<vmem>>, vector<8x1xf32>,
    %c0_21 = arith.constant 0 : index
    %c0_22 = arith.constant 0 : index
    %57 = vector.load %arg6[%c0_21, %c0_22] : memref<8x1xf32, #tpu.memory_space<vmem>>, vector<8x1xf32>
    tpu.vector_store %arg6[%c0_21, %c0_22], %45 {strides = array<i32>} : memref<8x1xf32, #tpu.memory_space<vmem>>, vector<8x1xf32>,
    %c0_23 = arith.constant 0 : index
    %c0_24 = arith.constant 0 : index
    %58 = vector.load %arg8[%c0_23, %c0_24] : memref<8x1xf32, #tpu.memory_space<vmem>>, vector<8x1xf32>
    %59 = arith.andi %30, %32 : vector<8x128xi1>
    %cst_25 = arith.constant 0.000000e+00 : f32
    %60 = vector.broadcast %cst_25 : f32 to vector<8x128xf32>
    %61 = arith.select %59, %41, %60 : vector<8x128xi1>, vector<8x128xf32>
    %cst_26 = arith.constant dense<0.000000e+00> : vector<8xf32>
    %62 = vector.multi_reduction <add>, %61, %cst_26 [1] : vector<8x128xf32> to vector<8xf32>
    %63 = vector.shape_cast %62 : vector<8xf32> to vector<8x1xf32>
    %64 = arith.addf %58, %63 : vector<8x1xf32>
    %c0_27 = arith.constant 0 : index
    %c0_28 = arith.constant 0 : index
    %65 = vector.load %arg8[%c0_27, %c0_28] : memref<8x1xf32, #tpu.memory_space<vmem>>, vector<8x1xf32>
    tpu.vector_store %arg8[%c0_27, %c0_28], %64 {strides = array<i32>} : memref<8x1xf32, #tpu.memory_space<vmem>>, vector<8x1xf32>,
    %c0_i32_29 = arith.constant 0 : i32
    %66 = arith.cmpi eq, %arg1, %c0_i32_29 : i32
    %67 = arith.extui %66 : i1 to i32
    %c0_i32_30 = arith.constant 0 : i32
    %68 = arith.cmpi ne, %67, %c0_i32_30 : i32
    scf.if %68 {
      %c0_31 = arith.constant 0 : index
      %c0_32 = arith.constant 0 : index
      %69 = vector.load %arg6[%c0_31, %c0_32] : memref<8x1xf32, #tpu.memory_space<vmem>>, vector<8x1xf32>
      %c0_33 = arith.constant 0 : index
      %c0_34 = arith.constant 0 : index
      %70 = vector.load %arg7[%c0_33, %c0_34] : memref<8x1xf32, #tpu.memory_space<vmem>>, vector<8x1xf32>
      %71 = math.log %70 : vector<8x1xf32>
      %72 = arith.addf %69, %71 : vector<8x1xf32>
      %c0_35 = arith.constant 0 : index
      %c0_36 = arith.constant 0 : index
      %73 = vector.load %arg8[%c0_35, %c0_36] : memref<8x1xf32, #tpu.memory_space<vmem>>, vector<8x1xf32>
      %74 = arith.subf %72, %73 : vector<8x1xf32>
      %c0_37 = arith.constant 0 : index
      %c0_38 = arith.constant 0 : index
      %75 = vector.load %arg5[%c0_37, %c0_38] : memref<8x1xf32, #tpu.memory_space<vmem>>, vector<8x1xf32>
      tpu.vector_store %arg5[%c0_37, %c0_38], %74 {strides = array<i32>} : memref<8x1xf32, #tpu.memory_space<vmem>>, vector<8x1xf32>,
    } else {
    }
    return
  }
  func.func @transform_0(%arg0: i32, %arg1: i32) -> (i32, i32) {
    %c0_i32 = arith.constant 0 : i32
    %c0_i32_0 = arith.constant 0 : i32
    return %arg0, %c0_i32 : i32, i32
  }
  func.func @transform_1(%arg0: i32, %arg1: i32) -> (i32, i32) {
    %c0_i32 = arith.constant 0 : i32
    %c0_i32_0 = arith.constant 0 : i32
    return %c0_i32, %arg1 : i32, i32
  }
  func.func @transform_2(%arg0: i32, %arg1: i32) -> (i32, i32) {
    %c0_i32 = arith.constant 0 : i32
    %c0_i32_0 = arith.constant 0 : i32
    return %arg0, %c0_i32 : i32, i32
  }
  func.func @transform_3(%arg0: i32, %arg1: i32) -> (i32, i32) {
    %c0_i32 = arith.constant 0 : i32
    %c0_i32_0 = arith.constant 0 : i32
    return %arg0, %c0_i32 : i32, i32
  }
}

</mosaic_0001>

<llo_original>
// kernel: tpu_custom_call.1
$region0: #{tpu_custom_call.1}
  #allocation0 [shape = 'u32[]', space=smem, size = 0x4, offset = 0x4, fixed_abs, tag = 'smem constant byte address 0x4 - core index']
  #allocation1 [shape = 'u32[144,128]{1,0:T(1,128)}', space=vmem, size = 0x12000, scoped, tag = 'internal scratch']
  #allocation2 [shape = 'f32[8,1]{1,0:T(8,128)}', space=vmem, size = 0x1000, scoped, tag = 'scratch operand']
  #allocation3 [shape = 'f32[8,1]{1,0:T(8,128)}', space=vmem, size = 0x1000, scoped, tag = 'scratch operand']
  #allocation4 [shape = 'f32[8,1]{1,0:T(8,128)}', space=vmem, size = 0x1000, scoped, tag = 'scratch operand']
  %s0 = inlined_call_operand.vmem [shape: f32[8,32], index: 0, kind: input, shape index: {}]
  %s1 = inlined_call_operand.hbm [shape: f32[32,128], index: 1, kind: input, shape index: {}]
  %s2 = inlined_call_operand.vmem [shape: s32[8,1], index: 2, kind: input, shape index: {}]
  %s3 = inlined_call_operand.vmem [shape: f32[8,1], index: 3, kind: output, shape index: {}]
  %s4 = sld [smem:[#allocation0]]
  $region34: #{tpu_custom_call.1} parent=0
    _
  %s6 = ssub.s32 1, %s4
  %s7 = scalar_select 0, %s6, %s4
  $region1: #{tpu_custom_call.1} parent=0
    #allocation5 [shape = 'u8[16384]{0}', space=vmem, size = 0x4000, scoped, tag = 'input window, operand 1, single buffered']
    #allocation6 [shape = 's32[1]{0}', space=sflag, size = 0x4, scoped, tag = 'scoped memory for tpu_custom_call.1']
    %8 = vsyncpa [#allocation6], 0
    // Predicated region
    $region2: #{tpu_custom_call.1} parent=1 // pred_check
      _
    $region3: #{tpu_custom_call.1} parent=1 // pred_check_branch
      %10 = sbr.rel (0) target = $region5
    $region4: #{tpu_custom_call.1} parent=1 // pred_region
      _
    $region5: #{tpu_custom_call.1} parent=1 // pred_fallthru
      _
    // Predicated region
    $region6: #{tpu_custom_call.1} parent=1 // pred_check
      _
    $region7: #{tpu_custom_call.1} parent=1 // pred_check_branch
      %12 = sbr.rel (0) target = $region9
    $region8: #{tpu_custom_call.1} parent=1 // pred_region
      %s14 = ssub.s32 512, 512
      %15 = vsyncadd [#allocation6], %s14
      %s16 = sshll.u32 [#allocation5], 4
      %s17 = int_to_ptr.vmem [resolvable:$true] %s16
      %22 = dma.hbm_to_vmem [thread:$0]  %s1, 512, %s17, [#allocation6], 128, 128, 8
    $region9: #{tpu_custom_call.1} parent=1 // pred_fallthru
      _
    // Predicated region
    $region10: #{tpu_custom_call.1} parent=1 // pred_check
      _
    $region11: #{tpu_custom_call.1} parent=1 // pred_check_branch
      %24 = sbr.rel (0) target = $region13
    $region12: #{tpu_custom_call.1} parent=1 // pred_region
      _
    $region13: #{tpu_custom_call.1} parent=1 // pred_fallthru
      _
    // Predicated region
    $region14: #{tpu_custom_call.1} parent=1 // pred_check
      _
    $region15: #{tpu_custom_call.1} parent=1 // pred_check_branch
      %26 = sbr.rel (0) target = $region17
    $region16: #{tpu_custom_call.1} parent=1 // pred_region
      %27 = dma.done [#allocation6], 512
    $region17: #{tpu_custom_call.1} parent=1 // pred_fallthru
      _
    %p29 = scmp.eq.s32.totalorder 0, 0
    // Predicated region
    $region18: #{tpu_custom_call.1} parent=1 // pred_check
      %p30 = pneg %p29
    $region19: #{tpu_custom_call.1} parent=1 // pred_check_branch
      %32 = sbr.rel (%p30) target = $region21
    $region20: #{tpu_custom_call.1} parent=1 // pred_region
      %vm33 = vcmask 7168
      %34 = vst.msk [vmem:[#allocation2] sm:$0xff] %vm33, -inf
      %35 = vst.msk [vmem:[#allocation3] sm:$0xff] %vm33, 0.0
      %36 = vst.msk [vmem:[#allocation4] sm:$0xff] %vm33, 0.0
    $region21: #{tpu_custom_call.1} parent=1 // pred_fallthru
      _
    %v37 = vld [vmem:[%s0] sm:$0xff]
    %v38 = vmul.f32 %v37, %v37
    %vm39 = vcmask 261120
    %v40 = vsel %vm39, %v38, 0.0
    %41 = vadd.xlane.f32.xlu0 %v40
    %v42 = vpop.xlane.xlu0 %41
    %v43 = vmax.f32 %v42, 1e-24
    %v44 = vrsqrt.pop %v43
    %v45 = vmul.f32 %v37, %v44
    %v46 = vld [vmem:[#allocation5] sm:$0xff]
    %v47 = vld [vmem:[#allocation5 + $0x8] sm:$0xff]
    %v48 = vld [vmem:[#allocation5 + $0x10] sm:$0xff]
    %v49 = vld [vmem:[#allocation5 + $0x18] sm:$0xff]
    %v50 = vmul.f32 %v46, %v46
    %v51 = vmul.f32 %v47, %v47
    %v52 = vmul.f32 %v48, %v48
    %v53 = vmul.f32 %v49, %v49
    %v54 = vadd.f32 %v50, %v51
    %v55 = vadd.f32 %v54, %v52
    %v56 = vadd.f32 %v55, %v53
    %v57 = vrot.slane %v56, 4
    %v58 = vadd.f32 %v56, %v57
    %v59 = vrot.slane %v58, 2
    %v60 = vadd.f32 %v58, %v59
    %v61 = vrot.slane %v60, 1
    %v62 = vadd.f32 %v60, %v61
    %v63 = vmax.f32 %v62, 1e-24
    %v64 = vrsqrt.pop %v63
    %v65 = vmul.f32 %v46, %v64
    %v66 = vmul.f32 %v47, %v64
    %v67 = vmul.f32 %v48, %v64
    %v68 = vmul.f32 %v49, %v64
    %v69 = vpack.c.bf16 %v45, %v45
    %v70 = vpack.c.bf16 %v66, %v65
    %v71 = vpack.c.bf16 %v68, %v67
    %v73 = vsel %vm39, %v69, 0
    %75 = vmatprep.subr.bf16.mxu0 0
    %76 = vmatpush1.bf16.msra.mxu0 %v70
    %77 = vmatprep.subr.bf16.mxu0 0
    %78 = vmatpush1.bf16.msra.mxu0 %v71
    %79 = vmatprep.subr.bf16.mxu0 0
    %80 = vmatpush1.bf16.msra.mxu0 0
    %81 = vmatprep.subr.bf16.mxu0 0
    %82 = vmatpush1.bf16.msra.mxu0 0
    %83 = vmatprep.subr.bf16.mxu0 0
    %84 = vmatpush1.bf16.msra.mxu0 0
    %85 = vmatprep.subr.bf16.mxu0 0
    %86 = vmatpush1.bf16.msra.mxu0 0
    %87 = vmatprep.subr.bf16.mxu0 0
    %88 = vmatpush1.bf16.msra.mxu0 0
    %89 = vmatprep.subr.bf16.mxu0 0
    %90 = vmatpush1.bf16.msra.mxu0 0
    %91 = vmatprep.subr.bf16.mxu0 0
    %92 = vmatpush1.bf16.msra.mxu0 0
    %93 = vmatprep.subr.bf16.mxu0 0
    %94 = vmatpush1.bf16.msra.mxu0 0
    %95 = vmatprep.subr.bf16.mxu0 0
    %96 = vmatpush1.bf16.msra.mxu0 0
    %97 = vmatprep.subr.bf16.mxu0 0
    %98 = vmatpush1.bf16.msra.mxu0 0
    %99 = vmatprep.subr.bf16.mxu0 0
    %100 = vmatpush1.bf16.msra.mxu0 0
    %101 = vmatprep.subr.bf16.mxu0 0
    %102 = vmatpush1.bf16.msra.mxu0 0
    %103 = vmatprep.subr.bf16.mxu0 0
    %104 = vmatpush1.bf16.msra.mxu0 0
    %105 = vmatprep.subr.bf16.mxu0 0
    %106 = vmatpush1.bf16.msra.mxu0 0
    %107 = vmatprep.mubr.bf16.mxu0 0
    %108 = vmatmul.mubr.bf16.gmra.mrb[0].mxu0 %v73
    %v109 = vpop.f32.mrb[0].mxu0
    %v110 = vadd.f32 0.0, %v109
    %v111 = vpop.f32.mrb[0].mxu0
    %v112 = vpop.f32.mrb[0].mxu0
    %v113 = vpop.f32.mrb[0].mxu0
    %114 = vdwg.mxu0
    %v115 = vlaneseq
    %v116 = vand.u32 %v115, 127
    %s117 = smul.u32 0, 128
    %v118 = vstv %s117
    %v119 = vadd.s32 %v116, %v118
    %v120 = vld [vmem:[%s2] sm:$0xff]
    %121 = vset.pattern.permute.xlu0 0
    %122 = vperm.xlu0 %121, %v120
    %v123 = vpop.permute.xlu0 %122
    %vm124 = vcmp.eq.s32.totalorder %v119, %v123
    %vm125 = vcmp.lt.s32.totalorder %v119, 16
    %v126 = vmul.f32 %v110, 30.0
    %v127 = vsel %vm124, 1, 0
    %v128 = vcvt.s32.f32 %v127
    %v129 = vmul.f32 %v128, 12.0
    %v130 = vsub.f32 %v126, %v129
    %v131 = vsel %vm125, %v130, -1e+30
    %v132 = vld [vmem:[#allocation2] sm:$0xff]
    %133 = vmax.xlane.f32.xlu0 %v131
    %v134 = vpop.xlane.xlu0 %133
    %v135 = vmax.f32 %v132, %v134
    %v136 = vsub.f32 %v132, %v135
    %v137 = vmul.f32 %v136, 1.442695
    %v138 = vpow.pop %v137
    %140 = vset.pattern.permute.xlu0 0
    %141 = vperm.xlu0 %140, %v135
    %v142 = vpop.permute.xlu0 %141
    %v144 = vsub.f32 %v131, %v142
    %v145 = vmul.f32 %v144, 1.442695
    %v146 = vpow.pop %v145
    %v147 = vld [vmem:[#allocation3] sm:$0xff]
    %v148 = vmul.f32 %v138, %v147
    %149 = vadd.xlane.f32.xlu0 %v146
    %v150 = vpop.xlane.xlu0 %149
    %v151 = vadd.f32 %v148, %v150
    %vm152 = vcmask 7168
    %153 = vst.msk [vmem:[#allocation3] sm:$0xff] %vm152, %v151
    %154 = vst.msk [vmem:[#allocation2] sm:$0xff] %vm152, %v135
    %v155 = vld [vmem:[#allocation4] sm:$0xff]
    %vm156 = vmand %vm124, %vm125
    %v157 = vsel %vm156, %v131, 0.0
    %158 = vadd.xlane.f32.xlu0 %v157
    %v159 = vpop.xlane.xlu0 %158
    %v160 = vadd.f32 %v155, %v159
    %161 = vst.msk [vmem:[#allocation4] sm:$0xff] %vm152, %v160
    // Predicated region
    $region22: #{tpu_custom_call.1} parent=1 // pred_check
      %p162 = pneg %p29
    $region23: #{tpu_custom_call.1} parent=1 // pred_check_branch
      %164 = sbr.rel (%p162) target = $region25
    $region24: #{tpu_custom_call.1} parent=1 // pred_region
      %v165 = vld [vmem:[#allocation2] sm:$0xff]
      %v166 = vld [vmem:[#allocation3] sm:$0xff]
      %v167 = vlog2.pop %v166
      %v168 = vmul.f32 %v167, 0.6931472
      %v169 = vadd.f32 %v165, %v168
      %v170 = vld [vmem:[#allocation4] sm:$0xff]
      %v171 = vsub.f32 %v169, %v170
      %172 = vst.msk [vmem:[%s3] sm:$0xff] %vm152, %v171
    $region25: #{tpu_custom_call.1} parent=1 // pred_fallthru
      _
    // Predicated region
    $region26: #{tpu_custom_call.1} parent=1 // pred_check
      _
    $region27: #{tpu_custom_call.1} parent=1 // pred_check_branch
      %174 = sbr.rel (0) target = $region29
    $region28: #{tpu_custom_call.1} parent=1 // pred_region
      _
    $region29: #{tpu_custom_call.1} parent=1 // pred_fallthru
      _
    // Predicated region
    $region30: #{tpu_custom_call.1} parent=1 // pred_check
      _
    $region31: #{tpu_custom_call.1} parent=1 // pred_check_branch
      %176 = sbr.rel (0) target = $region33
    $region32: #{tpu_custom_call.1} parent=1 // pred_region
      _
    $region33: #{tpu_custom_call.1} parent=1 // pred_fallthru
      _
    %177 = vsyncpa [#allocation6], 1

</llo_original>
